<compile_context>
chip_gen: v5e
topology: v5e:2x2
jax: 0.10.0
libtpu: 0.0.40
codegen_flags: <defaults>
</compile_context>

<pallas_src>
import functools

import jax
import jax.numpy as jnp
from jax import lax
from jax.experimental import pallas as pl
from jax.experimental.pallas import tpu as pltpu

_NEG = -1e30  # "minus infinity" for knocked-out scores (diagonal / padding)


def _contrastive_kernel(sims_ref, im_ref, s_ref, dm_row_ref, dm_col_ref,
                        out_cs_ref, out_ci_ref, cs_blk_ref,
                        *, ratio, b_actual, needs_mask):
    i = pl.program_id(0)          # row block
    j = pl.program_id(1)          # column block (reduction axis for cost_s)
    tb = sims_ref.shape[0]

    # Blended scores tile; im was pre-scaled by (1 - ratio) in the wrapper so
    # the blend is one mul + add per element.  bf16 MXU, f32 accumulation.
    scores = ratio * sims_ref[...] + lax.dot_general(
        im_ref[...], s_ref[...],
        dimension_numbers=(((1,), (1,)), ((), ())),
        preferred_element_type=jnp.float32)

    if needs_mask:
        # Edge-tile masking for padded rows/columns (only traced when padded).
        # TODO(synk): restrict the mask work to the edge blocks via pl.when.
        row_ok = (i * tb + lax.broadcasted_iota(jnp.int32, (tb, 1), 0)) < b_actual
        col_ok = (j * tb + lax.broadcasted_iota(jnp.int32, (1, tb), 1)) < b_actual
        scores = jnp.where(row_ok & col_ok, scores, _NEG)

    dm_row = dm_row_ref[...]      # (tb, 1)  diag - margin for this row block
    dm_col = dm_col_ref[...]      # (1, tb)  diag - margin for this col block

    def _both(sc):
        # cost_s (caption retrieval): per-row max over this column block.
        cs = jnp.maximum(sc - dm_row, 0.0)
        cs_blk_ref[...] = jnp.max(cs, axis=1, keepdims=True)
        # cost_im (image retrieval): per-column partial max of this row block.
        ci = jnp.maximum(sc - dm_col, 0.0)
        out_ci_ref[0] = jnp.max(ci, axis=0, keepdims=True)

    @pl.when(i == j)              # diagonal block: knock out the diagonal once
    def _():
        eye = (lax.broadcasted_iota(jnp.int32, (tb, 1), 0)
               == lax.broadcasted_iota(jnp.int32, (1, tb), 1))
        _both(jnp.where(eye, _NEG, scores))

    @pl.when(i != j)              # off-diagonal blocks: no eye/iota work
    def _():
        _both(scores)

    # Accumulate the per-row running max directly in the resident output block.
    @pl.when(j == 0)
    def _():
        out_cs_ref[...] = cs_blk_ref[...]

    @pl.when(j > 0)
    def _():
        out_cs_ref[...] = jnp.maximum(out_cs_ref[...], cs_blk_ref[...])


def contrastive_loss(im, s, sims_local, *, margin=0.0, ratio=0.5, tile_b=512):
    """Pallas implementation of ContrastiveLoss.forward (returns a scalar)."""
    assert im.ndim == 2 and s.ndim == 2 and sims_local.ndim == 2
    B, D = im.shape
    assert s.shape == (B, D) and sims_local.shape == (B, B)
    margin = float(margin)
    ratio = float(ratio)

    # Tile selection: big tiles amortize per-step overhead and fill the MXU,
    # capped at 512 (v7x 64 MiB VMEM), multiple of 128 (lane-aligned sims
    # blocks), and prefer >= 2 row blocks so the "parallel" i axis can shard
    # across v7x's two TensorCores.
    tile_b = max(128, (min(int(tile_b), 512) // 128) * 128)
    while tile_b > 128 and B <= tile_b:
        tile_b //= 2
    nb = pl.cdiv(B, tile_b)
    b_pad = nb * tile_b
    pad = b_pad - B
    needs_mask = pad > 0

    f32 = jnp.float32
    im32 = im.astype(f32)
    s32 = s.astype(f32)
    sims = sims_local.astype(f32)

    # Blended diagonal precomputed in f32 (O(B*D)); fold the margin in so the
    # in-kernel hinge is a single subtract + clamp.
    diag = ratio * jnp.diagonal(sims) + (1.0 - ratio) * jnp.sum(im32 * s32, axis=1)
    dm = diag - margin

    # Fold (1 - ratio) into the image embeddings; bf16 operands for the MXU.
    im_q = (im32 * (1.0 - ratio)).astype(jnp.bfloat16)
    s_q = s32.astype(jnp.bfloat16)

    if needs_mask:
        im_q = jnp.pad(im_q, ((0, pad), (0, 0)))
        s_q = jnp.pad(s_q, ((0, pad), (0, 0)))
        sims = jnp.pad(sims, ((0, pad), (0, pad)))
        dm = jnp.pad(dm, (0, pad))
    dm_row = dm.reshape(b_pad, 1)
    dm_col = dm.reshape(1, b_pad)

    kernel = functools.partial(_contrastive_kernel, ratio=ratio,
                               b_actual=B, needs_mask=needs_mask)

    grid_spec = pltpu.PrefetchScalarGridSpec(
        num_scalar_prefetch=0,
        grid=(nb, nb),
        in_specs=[
            pl.BlockSpec((tile_b, tile_b), lambda i, j: (i, j)),   # sims[i, j]
            pl.BlockSpec((tile_b, D), lambda i, j: (i, 0)),        # (1-ratio)*im[i], bf16
            pl.BlockSpec((tile_b, D), lambda i, j: (j, 0)),        # s[j], bf16
            pl.BlockSpec((tile_b, 1), lambda i, j: (i, 0)),        # (diag - margin) rows
            pl.BlockSpec((1, tile_b), lambda i, j: (0, j)),        # (diag - margin) cols
        ],
        out_specs=[
            pl.BlockSpec((tile_b, 1), lambda i, j: (i, 0)),        # cost_s row-max acc
            pl.BlockSpec((1, 1, tile_b), lambda i, j: (i, 0, j)),  # cost_im partial maxes
        ],
        scratch_shapes=[pltpu.VMEM((tile_b, 1), jnp.float32)],
    )

    cs_rows, ci_part = pl.pallas_call(
        kernel,
        out_shape=(jax.ShapeDtypeStruct((b_pad, 1), f32),
                   jax.ShapeDtypeStruct((nb, 1, b_pad), f32)),
        grid_spec=grid_spec,
        compiler_params=pltpu.CompilerParams(
            dimension_semantics=("parallel", "arbitrary"),
            vmem_limit_bytes=32 * 1024 * 1024),
    )(sims, im_q, s_q, dm_row, dm_col)

    cost_s = jnp.sum(cs_rows[:B, 0])
    cost_im = jnp.sum(jnp.max(ci_part[:, 0, :], axis=0)[:B])
    return cost_s + cost_im


def _reference(im, s, sims_local, margin, ratio):
    """Pure-f32 reference mirroring the PyTorch forward."""
    scores = ratio * sims_local + (1.0 - ratio) * jnp.dot(im, s.T)
    diag = jnp.diagonal(scores)
    eye = jnp.eye(scores.shape[0], dtype=bool)
    cost_s = jnp.where(eye, 0.0, jnp.maximum(margin + scores - diag[:, None], 0.0))
    cost_im = jnp.where(eye, 0.0, jnp.maximum(margin + scores - diag[None, :], 0.0))
    return jnp.sum(jnp.max(cost_s, axis=1)) + jnp.sum(jnp.max(cost_im, axis=0))


def _reference_kernel_numerics(im, s, sims_local, margin, ratio):
    """Reference matching the kernel's bf16-MXU / f32-diagonal numerics."""
    im_q = (im * (1.0 - ratio)).astype(jnp.bfloat16)
    s_q = s.astype(jnp.bfloat16)
    g = jnp.dot(im_q, s_q.T, preferred_element_type=jnp.float32)
    scores = ratio * sims_local + g
    diag = ratio * jnp.diagonal(sims_local) + (1.0 - ratio) * jnp.sum(im * s, axis=1)
    eye = jnp.eye(scores.shape[0], dtype=bool)
    cost_s = jnp.where(eye, 0.0, jnp.maximum(margin + scores - diag[:, None], 0.0))
    cost_im = jnp.where(eye, 0.0, jnp.maximum(margin + scores - diag[None, :], 0.0))
    return jnp.sum(jnp.max(cost_s, axis=1)) + jnp.sum(jnp.max(cost_im, axis=0))


if __name__ == "__main__":
    margin = 0.2   # opt: hinge margin
    ratio = 0.6    # opt.ratio: blend of local vs global similarity
    key = jax.random.PRNGKey(0)

    # (256, 64): aligned, multi-block (nb=2) path.  (200, 48): pad+mask path.
    for (B, D) in [(256, 64), (200, 48)]:
        key, k_im, k_s, k_local = jax.random.split(key, 4)
        im = jax.random.normal(k_im, (B, D), dtype=jnp.float32)
        s = jax.random.normal(k_s, (B, D), dtype=jnp.float32)
        # normalize so im @ s.T is a true cosine similarity (as the module assumes)
        im = im / jnp.linalg.norm(im, axis=1, keepdims=True)
        s = s / jnp.linalg.norm(s, axis=1, keepdims=True)
        sims_local = jax.random.uniform(k_local, (B, B), dtype=jnp.float32)

        loss = contrastive_loss(im, s, sims_local, margin=margin, ratio=ratio)
        loss = jax.block_until_ready(loss)

        ref_k = _reference_kernel_numerics(im, s, sims_local, margin, ratio)
        ref_f = _reference(im, s, sims_local, margin, ratio)
        assert jnp.allclose(loss, ref_k, rtol=1e-3, atol=2e-2), (B, loss, ref_k)
        assert jnp.allclose(loss, ref_f, rtol=2e-2, atol=2e-1), (B, loss, ref_f)

    print("KERNEL_OK")
</pallas_src>

<mosaic_0001>
module attributes {stable_mosaic.version = 11 : i64} {
  func.func @_contrastive_kernel(%arg0: i32, %arg1: i32, %arg2: memref<128x128xf32, #tpu.memory_space<vmem>>, %arg3: memref<128x64xbf16, #tpu.memory_space<vmem>>, %arg4: memref<128x64xbf16, #tpu.memory_space<vmem>>, %arg5: memref<128x1xf32, #tpu.memory_space<vmem>>, %arg6: memref<1x128xf32, #tpu.memory_space<vmem>>, %arg7: memref<128x1xf32, #tpu.memory_space<vmem>>, %arg8: memref<1x1x128xf32, #tpu.memory_space<vmem>>, %arg9: memref<128x1xf32, #tpu.memory_space<vmem>>) attributes {dimension_semantics = [#tpu.dimension_semantics<parallel>, #tpu.dimension_semantics<arbitrary>], iteration_bounds = array<i64: 2, 2>, scalar_prefetch = 0 : i64, scratch_operands = 1 : i64, tpu.core_type = #tpu.core_type<tc>, window_params = [{transform_indices = @transform_0, window_bounds = array<i64: 128, 128>}, {transform_indices = @transform_1, window_bounds = array<i64: 128, 64>}, {transform_indices = @transform_2, window_bounds = array<i64: 128, 64>}, {transform_indices = @transform_3, window_bounds = array<i64: 128, 1>}, {transform_indices = @transform_4, window_bounds = array<i64: 1, 128>}, {transform_indices = @transform_5, window_bounds = array<i64: 128, 1>}, {transform_indices = @transform_6, window_bounds = array<i64: 1, 1, 128>}]} {
    %c0 = arith.constant 0 : index
    %c0_0 = arith.constant 0 : index
    %0 = vector.load %arg2[%c0, %c0_0] : memref<128x128xf32, #tpu.memory_space<vmem>>, vector<128x128xf32>
    %cst = arith.constant 6.000000e-01 : f32
    %1 = vector.broadcast %cst : f32 to vector<128x128xf32>
    %2 = arith.mulf %1, %0 : vector<128x128xf32>
    %c0_1 = arith.constant 0 : index
    %c0_2 = arith.constant 0 : index
    %3 = vector.load %arg3[%c0_1, %c0_2] : memref<128x64xbf16, #tpu.memory_space<vmem>>, vector<128x64xbf16>
    %c0_3 = arith.constant 0 : index
    %c0_4 = arith.constant 0 : index
    %4 = vector.load %arg4[%c0_3, %c0_4] : memref<128x64xbf16, #tpu.memory_space<vmem>>, vector<128x64xbf16>
    %cst_5 = arith.constant dense<0.000000e+00> : vector<128x128xf32>
    %5 = tpu.matmul %3, %4, %cst_5 {dimension_numbers = #tpu.dot_dimension_numbers<[1], [1], [0], [0], [0, 0, 1, 0], [], []>} : vector<128x64xbf16>, vector<128x64xbf16>, vector<128x128xf32> -> vector<128x128xf32>
    %6 = arith.addf %2, %5 : vector<128x128xf32>
    %c0_6 = arith.constant 0 : index
    %c0_7 = arith.constant 0 : index
    %7 = vector.load %arg5[%c0_6, %c0_7] : memref<128x1xf32, #tpu.memory_space<vmem>>, vector<128x1xf32>
    %c0_8 = arith.constant 0 : index
    %c0_9 = arith.constant 0 : index
    %8 = vector.load %arg6[%c0_8, %c0_9] : memref<1x128xf32, #tpu.memory_space<vmem>>, vector<1x128xf32>
    %9 = arith.cmpi eq, %arg0, %arg1 : i32
    %10 = arith.extui %9 : i1 to i32
    %c0_i32 = arith.constant 0 : i32
    %11 = arith.cmpi ne, %10, %c0_i32 : i32
    scf.if %11 {
      %21 = tpu.iota {dimensions = array<i32: 0>} : vector<128x1xi32>
      %22 = tpu.iota {dimensions = array<i32: 1>} : vector<1x128xi32>
      %23 = vector.broadcast %21 : vector<128x1xi32> to vector<128x128xi32>
      %24 = vector.broadcast %22 : vector<1x128xi32> to vector<128x128xi32>
      %25 = arith.cmpi eq, %23, %24 : vector<128x128xi32>
      %cst_15 = arith.constant -1.000000e+30 : f32
      %26 = vector.broadcast %cst_15 : f32 to vector<128x128xf32>
      %27 = arith.select %25, %26, %6 : vector<128x128xi1>, vector<128x128xf32>
      %28 = vector.broadcast %7 : vector<128x1xf32> to vector<128x128xf32>
      %29 = arith.subf %27, %28 : vector<128x128xf32>
      %cst_16 = arith.constant 0.000000e+00 : f32
      %30 = vector.broadcast %cst_16 : f32 to vector<128x128xf32>
      %31 = arith.maximumf %29, %30 : vector<128x128xf32>
      %cst_17 = arith.constant dense<0xFF800000> : vector<128xf32>
      %32 = vector.multi_reduction <maximumf>, %31, %cst_17 [1] : vector<128x128xf32> to vector<128xf32>
      %33 = vector.shape_cast %32 : vector<128xf32> to vector<128x1xf32>
      %c0_18 = arith.constant 0 : index
      %c0_19 = arith.constant 0 : index
      %34 = vector.load %arg9[%c0_18, %c0_19] : memref<128x1xf32, #tpu.memory_space<vmem>>, vector<128x1xf32>
      tpu.vector_store %arg9[%c0_18, %c0_19], %33 {strides = array<i32>} : memref<128x1xf32, #tpu.memory_space<vmem>>, vector<128x1xf32>,
      %35 = vector.broadcast %8 : vector<1x128xf32> to vector<128x128xf32>
      %36 = arith.subf %27, %35 : vector<128x128xf32>
      %cst_20 = arith.constant 0.000000e+00 : f32
      %37 = vector.broadcast %cst_20 : f32 to vector<128x128xf32>
      %38 = arith.maximumf %36, %37 : vector<128x128xf32>
      %cst_21 = arith.constant dense<0xFF800000> : vector<128xf32>
      %39 = vector.multi_reduction <maximumf>, %38, %cst_21 [0] : vector<128x128xf32> to vector<128xf32>
      %40 = vector.shape_cast %39 : vector<128xf32> to vector<1x128xf32>
      %c0_22 = arith.constant 0 : index
      %c0_23 = arith.constant 0 : index
      %c0_24 = arith.constant 0 : index
      %41 = vector.load %arg8[%c0_22, %c0_23, %c0_24] : memref<1x1x128xf32, #tpu.memory_space<vmem>>, vector<1x1x128xf32>
      %42 = vector.shape_cast %41 : vector<1x1x128xf32> to vector<1x128xf32>
      %43 = vector.shape_cast %40 : vector<1x128xf32> to vector<1x1x128xf32>
      tpu.vector_store %arg8[%c0_22, %c0_23, %c0_24], %43 {strides = array<i32>} : memref<1x1x128xf32, #tpu.memory_space<vmem>>, vector<1x1x128xf32>,
    } else {
    }
    %12 = arith.cmpi ne, %arg0, %arg1 : i32
    %13 = arith.extui %12 : i1 to i32
    %c0_i32_10 = arith.constant 0 : i32
    %14 = arith.cmpi ne, %13, %c0_i32_10 : i32
    scf.if %14 {
      %21 = vector.broadcast %7 : vector<128x1xf32> to vector<128x128xf32>
      %22 = arith.subf %6, %21 : vector<128x128xf32>
      %cst_15 = arith.constant 0.000000e+00 : f32
      %23 = vector.broadcast %cst_15 : f32 to vector<128x128xf32>
      %24 = arith.maximumf %22, %23 : vector<128x128xf32>
      %cst_16 = arith.constant dense<0xFF800000> : vector<128xf32>
      %25 = vector.multi_reduction <maximumf>, %24, %cst_16 [1] : vector<128x128xf32> to vector<128xf32>
      %26 = vector.shape_cast %25 : vector<128xf32> to vector<128x1xf32>
      %c0_17 = arith.constant 0 : index
      %c0_18 = arith.constant 0 : index
      %27 = vector.load %arg9[%c0_17, %c0_18] : memref<128x1xf32, #tpu.memory_space<vmem>>, vector<128x1xf32>
      tpu.vector_store %arg9[%c0_17, %c0_18], %26 {strides = array<i32>} : memref<128x1xf32, #tpu.memory_space<vmem>>, vector<128x1xf32>,
      %28 = vector.broadcast %8 : vector<1x128xf32> to vector<128x128xf32>
      %29 = arith.subf %6, %28 : vector<128x128xf32>
      %cst_19 = arith.constant 0.000000e+00 : f32
      %30 = vector.broadcast %cst_19 : f32 to vector<128x128xf32>
      %31 = arith.maximumf %29, %30 : vector<128x128xf32>
      %cst_20 = arith.constant dense<0xFF800000> : vector<128xf32>
      %32 = vector.multi_reduction <maximumf>, %31, %cst_20 [0] : vector<128x128xf32> to vector<128xf32>
      %33 = vector.shape_cast %32 : vector<128xf32> to vector<1x128xf32>
      %c0_21 = arith.constant 0 : index
      %c0_22 = arith.constant 0 : index
      %c0_23 = arith.constant 0 : index
      %34 = vector.load %arg8[%c0_21, %c0_22, %c0_23] : memref<1x1x128xf32, #tpu.memory_space<vmem>>, vector<1x1x128xf32>
      %35 = vector.shape_cast %34 : vector<1x1x128xf32> to vector<1x128xf32>
      %36 = vector.shape_cast %33 : vector<1x128xf32> to vector<1x1x128xf32>
      tpu.vector_store %arg8[%c0_21, %c0_22, %c0_23], %36 {strides = array<i32>} : memref<1x1x128xf32, #tpu.memory_space<vmem>>, vector<1x1x128xf32>,
    } else {
    }
    %c0_i32_11 = arith.constant 0 : i32
    %15 = arith.cmpi eq, %arg1, %c0_i32_11 : i32
    %16 = arith.extui %15 : i1 to i32
    %c0_i32_12 = arith.constant 0 : i32
    %17 = arith.cmpi ne, %16, %c0_i32_12 : i32
    scf.if %17 {
      %c0_15 = arith.constant 0 : index
      %c0_16 = arith.constant 0 : index
      %21 = vector.load %arg9[%c0_15, %c0_16] : memref<128x1xf32, #tpu.memory_space<vmem>>, vector<128x1xf32>
      %c0_17 = arith.constant 0 : index
      %c0_18 = arith.constant 0 : index
      %22 = vector.load %arg7[%c0_17, %c0_18] : memref<128x1xf32, #tpu.memory_space<vmem>>, vector<128x1xf32>
      tpu.vector_store %arg7[%c0_17, %c0_18], %21 {strides = array<i32>} : memref<128x1xf32, #tpu.memory_space<vmem>>, vector<128x1xf32>,
    } else {
    }
    %c0_i32_13 = arith.constant 0 : i32
    %18 = arith.cmpi sgt, %arg1, %c0_i32_13 : i32
    %19 = arith.extui %18 : i1 to i32
    %c0_i32_14 = arith.constant 0 : i32
    %20 = arith.cmpi ne, %19, %c0_i32_14 : i32
    scf.if %20 {
      %c0_15 = arith.constant 0 : index
      %c0_16 = arith.constant 0 : index
      %21 = vector.load %arg7[%c0_15, %c0_16] : memref<128x1xf32, #tpu.memory_space<vmem>>, vector<128x1xf32>
      %c0_17 = arith.constant 0 : index
      %c0_18 = arith.constant 0 : index
      %22 = vector.load %arg9[%c0_17, %c0_18] : memref<128x1xf32, #tpu.memory_space<vmem>>, vector<128x1xf32>
      %23 = arith.maximumf %21, %22 : vector<128x1xf32>
      %c0_19 = arith.constant 0 : index
      %c0_20 = arith.constant 0 : index
      %24 = vector.load %arg7[%c0_19, %c0_20] : memref<128x1xf32, #tpu.memory_space<vmem>>, vector<128x1xf32>
      tpu.vector_store %arg7[%c0_19, %c0_20], %23 {strides = array<i32>} : memref<128x1xf32, #tpu.memory_space<vmem>>, vector<128x1xf32>,
    } else {
    }
    return
  }
  func.func @transform_0(%arg0: i32, %arg1: i32) -> (i32, i32) {
    %c0_i32 = arith.constant 0 : i32
    return %arg0, %arg1 : i32, i32
  }
  func.func @transform_1(%arg0: i32, %arg1: i32) -> (i32, i32) {
    %c0_i32 = arith.constant 0 : i32
    %c0_i32_0 = arith.constant 0 : i32
    return %arg0, %c0_i32 : i32, i32
  }
  func.func @transform_2(%arg0: i32, %arg1: i32) -> (i32, i32) {
    %c0_i32 = arith.constant 0 : i32
    %c0_i32_0 = arith.constant 0 : i32
    return %arg1, %c0_i32 : i32, i32
  }
  func.func @transform_3(%arg0: i32, %arg1: i32) -> (i32, i32) {
    %c0_i32 = arith.constant 0 : i32
    %c0_i32_0 = arith.constant 0 : i32
    return %arg0, %c0_i32 : i32, i32
  }
  func.func @transform_4(%arg0: i32, %arg1: i32) -> (i32, i32) {
    %c0_i32 = arith.constant 0 : i32
    %c0_i32_0 = arith.constant 0 : i32
    return %c0_i32, %arg1 : i32, i32
  }
  func.func @transform_5(%arg0: i32, %arg1: i32) -> (i32, i32) {
    %c0_i32 = arith.constant 0 : i32
    %c0_i32_0 = arith.constant 0 : i32
    return %arg0, %c0_i32 : i32, i32
  }
  func.func @transform_6(%arg0: i32, %arg1: i32) -> (i32, i32, i32) {
    %c0_i32 = arith.constant 0 : i32
    %c0_i32_0 = arith.constant 0 : i32
    return %arg0, %c0_i32, %arg1 : i32, i32, i32
  }
}

</mosaic_0001>

<llo_original>
// kernel: tpu_custom_call.1
$region0: #{tpu_custom_call.1}
  #allocation0 [shape = 'u32[]', space=smem, size = 0x4, offset = 0x4, fixed_abs, tag = 'smem constant byte address 0x4 - core index']
  #allocation1 [shape = 'u32[72,128]{1,0:T(1,128)}', space=vmem, size = 0x9000, scoped, tag = 'internal scratch']
  #allocation2 [shape = 'f32[128,1]{1,0:T(8,128)}', space=vmem, size = 0x10000, scoped, tag = 'scratch operand']
  %s0 = inlined_call_operand.hbm [shape: f32[256,256], index: 0, kind: input, shape index: {}]
  %s1 = inlined_call_operand.vmem [shape: bf16[256,64], index: 1, kind: input, shape index: {}]
  %s2 = inlined_call_operand.vmem [shape: bf16[256,64], index: 2, kind: input, shape index: {}]
  %s3 = inlined_call_operand.vmem [shape: f32[256,1], index: 3, kind: input, shape index: {}]
  %s4 = inlined_call_operand.vmem [shape: f32[1,256], index: 4, kind: input, shape index: {}]
  %s5 = inlined_call_operand.vmem [shape: f32[256,1], index: 5, kind: output, shape index: {0}]
  %s6 = inlined_call_operand.hbm [shape: f32[2,1,256], index: 6, kind: output, shape index: {1}]
  %7 = xla_tuple %s5, %s6
  %s8 = sld [smem:[#allocation0]]
  $region81: #{tpu_custom_call.1} parent=0
    _
  %s10 = ssub.s32 1, %s8
  %s11 = scalar_select 0, %s10, %s8
  $region1: #{tpu_custom_call.1} parent=0
    #allocation3 [shape = 'u8[131072]{0}', space=vmem, size = 0x20000, scoped, tag = 'input window, operand 0']
    #allocation4 [shape = 's32[2]{0}', space=sflag, size = 0x8, scoped, tag = 'scoped memory for tpu_custom_call.1']
    #allocation5 [shape = 's32[2]{0}', space=sflag, size = 0x8, scoped, tag = 'scoped memory for tpu_custom_call.1']
    #allocation6 [shape = 'u8[1024]{0}', space=vmem, size = 0x400, scoped, tag = 'output window, operand 1']
    %12 = vsyncpa [#allocation4], 0
    %s13 = scalar_lea.sflag [#allocation4], 1
    %14 = vsyncpa %s13, 0
    %15 = vsyncpa [#allocation5], 0
    %s16 = scalar_lea.sflag [#allocation5], 1
    %17 = vsyncpa %s16, 0
    loop: start=0, step=1, limit=6
    $region2: #{tpu_custom_call.1} parent=1 // loop_pre_header
      _
    $region3: #{tpu_custom_call.1} parent=1 // loop_header
      %s19 = sphi 0, %s23
      %p20 = scmp.ge.s32.totalorder %s19, 6
      %s26 = sphi 0, %s38
      %s27 = sphi 0, %s34
      %s28 = sphi 0, %s26
      %s29 = sphi 0, %s27
      %s30 = sphi 0, %s28
      %s31 = sphi 0, %s29
      %s43 = sphi 0, %s45
      %s46 = sphi 0, %s43
      %s47 = sphi 0, %s46
      %s63 = sphi 0, %s47
      %s69 = sphi 0, %s71
      %s72 = sphi 0, %s69
      %s73 = sphi 0, %s72
      %s89 = sphi 0, %s73
      %s95 = sphi 0, %s97
      %s98 = sphi 0, %s95
      %s99 = sphi 0, %s98
      %s115 = sphi 0, %s99
      %s121 = sphi 0, %s123
      %s124 = sphi 0, %s121
      %s125 = sphi 0, %s124
      %s141 = sphi 0, %s125
      %s147 = sphi 0, %s149
      %s150 = sphi 0, %s147
      %s151 = sphi 0, %s150
      %s167 = sphi 0, %s151
      %s173 = sphi 0, %s175
      %s176 = sphi 0, %s173
      %s177 = sphi 0, %s176
      %s193 = sphi 0, %s177
      %s201 = sphi 0, %s203
      %s204 = sphi 0, %s201
      %s205 = sphi 0, %s204
      %s221 = sphi 0, %s205
    $region4: #{tpu_custom_call.1} parent=1 // loop_header_branch
      %22 = sbr.rel (%p20) target = $region8
    $region5: #{tpu_custom_call.1} parent=1 // loop_body
      %s24 = ssub.s32 %s19, 1
      %s25 = ssub.s32 %s19, 2
      %s32 = sadd.s32 1, %s27
      %p33 = scmp.ge.s32.totalorder %s32, 2
      %s34 = scalar_select %p33, 0, %s32
      %s35 = sadd.s32 1, %s26
      %s36 = scalar_select %p33, %s35, %s26
      %p37 = scmp.ge.s32.totalorder %s36, 2
      %s38 = scalar_select %p37, 0, %s36
      %s39 = ssub.s32 %s26, %s38
      %s40 = ssub.s32 %s27, %s34
      %s41 = sor.u32 %s39, %s40
      %p42 = scmp.eq.s32.totalorder %s41, 0
      %s44 = sadd.s32 %s43, 1
      %s45 = scalar_select %p42, %s43, %s44
      %p48 = pneg %p42
      %p49 = scmp.eq.s32.totalorder %s19, 3
      %p50 = por %p48, %p49
      %p51 = scmp.ne.s32.totalorder %s43, %s46
      %p52 = scmp.eq.s32.totalorder %s19, 0
      %p53 = por %p51, %p52
      %p54 = scmp.ne.s32.totalorder %s43, %s46
      %p55 = scmp.eq.s32.totalorder %s24, 3
      %p56 = por %p54, %p55
      %p57 = scmp.ne.s32.totalorder %s46, %s47
      %p58 = scmp.eq.s32.totalorder %s24, 0
      %p59 = por %p57, %p58
      %p60 = scmp.ne.s32.totalorder %s46, %s47
      %p61 = scmp.eq.s32.totalorder %s25, 3
      %p62 = por %p60, %p61
      %p64 = scmp.ne.s32.totalorder %s47, %s63
      %p65 = scmp.eq.s32.totalorder %s25, 0
      %p66 = por %p64, %p65
      %s67 = ssub.s32 %s26, %s38
      %p68 = scmp.eq.s32.totalorder %s67, 0
      %s70 = sadd.s32 %s69, 1
      %s71 = scalar_select %p68, %s69, %s70
      %p74 = pneg %p68
      %p75 = scmp.eq.s32.totalorder %s19, 3
      %p76 = por %p74, %p75
      %p77 = scmp.ne.s32.totalorder %s69, %s72
      %p78 = scmp.eq.s32.totalorder %s19, 0
      %p79 = por %p77, %p78
      %p80 = scmp.ne.s32.totalorder %s69, %s72
      %p81 = scmp.eq.s32.totalorder %s24, 3
      %p82 = por %p80, %p81
      %p83 = scmp.ne.s32.totalorder %s72, %s73
      %p84 = scmp.eq.s32.totalorder %s24, 0
      %p85 = por %p83, %p84
      %p86 = scmp.ne.s32.totalorder %s72, %s73
      %p87 = scmp.eq.s32.totalorder %s25, 3
      %p88 = por %p86, %p87
      %p90 = scmp.ne.s32.totalorder %s73, %s89
      %p91 = scmp.eq.s32.totalorder %s25, 0
      %p92 = por %p90, %p91
      %s93 = ssub.s32 %s27, %s34
      %p94 = scmp.eq.s32.totalorder %s93, 0
      %s96 = sadd.s32 %s95, 1
      %s97 = scalar_select %p94, %s95, %s96
      %p100 = pneg %p94
      %p101 = scmp.eq.s32.totalorder %s19, 3
      %p102 = por %p100, %p101
      %p103 = scmp.ne.s32.totalorder %s95, %s98
      %p104 = scmp.eq.s32.totalorder %s19, 0
      %p105 = por %p103, %p104
      %p106 = scmp.ne.s32.totalorder %s95, %s98
      %p107 = scmp.eq.s32.totalorder %s24, 3
      %p108 = por %p106, %p107
      %p109 = scmp.ne.s32.totalorder %s98, %s99
      %p110 = scmp.eq.s32.totalorder %s24, 0
      %p111 = por %p109, %p110
      %p112 = scmp.ne.s32.totalorder %s98, %s99
      %p113 = scmp.eq.s32.totalorder %s25, 3
      %p114 = por %p112, %p113
      %p116 = scmp.ne.s32.totalorder %s99, %s115
      %p117 = scmp.eq.s32.totalorder %s25, 0
      %p118 = por %p116, %p117
      %s119 = ssub.s32 %s26, %s38
      %p120 = scmp.eq.s32.totalorder %s119, 0
      %s122 = sadd.s32 %s121, 1
      %s123 = scalar_select %p120, %s121, %s122
      %p126 = pneg %p120
      %p127 = scmp.eq.s32.totalorder %s19, 3
      %p128 = por %p126, %p127
      %p129 = scmp.ne.s32.totalorder %s121, %s124
      %p130 = scmp.eq.s32.totalorder %s19, 0
      %p131 = por %p129, %p130
      %p132 = scmp.ne.s32.totalorder %s121, %s124
      %p133 = scmp.eq.s32.totalorder %s24, 3
      %p134 = por %p132, %p133
      %p135 = scmp.ne.s32.totalorder %s124, %s125
      %p136 = scmp.eq.s32.totalorder %s24, 0
      %p137 = por %p135, %p136
      %p138 = scmp.ne.s32.totalorder %s124, %s125
      %p139 = scmp.eq.s32.totalorder %s25, 3
      %p140 = por %p138, %p139
      %p142 = scmp.ne.s32.totalorder %s125, %s141
      %p143 = scmp.eq.s32.totalorder %s25, 0
      %p144 = por %p142, %p143
      %s145 = ssub.s32 %s27, %s34
      %p146 = scmp.eq.s32.totalorder %s145, 0
      %s148 = sadd.s32 %s147, 1
      %s149 = scalar_select %p146, %s147, %s148
      %p152 = pneg %p146
      %p153 = scmp.eq.s32.totalorder %s19, 3
      %p154 = por %p152, %p153
      %p155 = scmp.ne.s32.totalorder %s147, %s150
      %p156 = scmp.eq.s32.totalorder %s19, 0
      %p157 = por %p155, %p156
      %p158 = scmp.ne.s32.totalorder %s147, %s150
      %p159 = scmp.eq.s32.totalorder %s24, 3
      %p160 = por %p158, %p159
      %p161 = scmp.ne.s32.totalorder %s150, %s151
      %p162 = scmp.eq.s32.totalorder %s24, 0
      %p163 = por %p161, %p162
      %p164 = scmp.ne.s32.totalorder %s150, %s151
      %p165 = scmp.eq.s32.totalorder %s25, 3
      %p166 = por %p164, %p165
      %p168 = scmp.ne.s32.totalorder %s151, %s167
      %p169 = scmp.eq.s32.totalorder %s25, 0
      %p170 = por %p168, %p169
      %s171 = ssub.s32 %s26, %s38
      %p172 = scmp.eq.s32.totalorder %s171, 0
      %s174 = sadd.s32 %s173, 1
      %s175 = scalar_select %p172, %s173, %s174
      %p178 = pneg %p172
      %p179 = scmp.eq.s32.totalorder %s19, 3
      %p180 = por %p178, %p179
      %p181 = scmp.ne.s32.totalorder %s173, %s176
      %p182 = scmp.eq.s32.totalorder %s19, 0
      %p183 = por %p181, %p182
      %p184 = scmp.ne.s32.totalorder %s173, %s176
      %p185 = scmp.eq.s32.totalorder %s24, 3
      %p186 = por %p184, %p185
      %p187 = scmp.ne.s32.totalorder %s176, %s177
      %p188 = scmp.eq.s32.totalorder %s24, 0
      %p189 = por %p187, %p188
      %p190 = scmp.ne.s32.totalorder %s176, %s177
      %p191 = scmp.eq.s32.totalorder %s25, 3
      %p192 = por %p190, %p191
      %p194 = scmp.ne.s32.totalorder %s177, %s193
      %p195 = scmp.eq.s32.totalorder %s25, 0
      %p196 = por %p194, %p195
      %s197 = ssub.s32 %s26, %s38
      %s198 = ssub.s32 %s27, %s34
      %s199 = sor.u32 %s197, %s198
      %p200 = scmp.eq.s32.totalorder %s199, 0
      %s202 = sadd.s32 %s201, 1
      %s203 = scalar_select %p200, %s201, %s202
      %p206 = pneg %p200
      %p207 = scmp.eq.s32.totalorder %s19, 3
      %p208 = por %p206, %p207
      %p209 = scmp.ne.s32.totalorder %s201, %s204
      %p210 = scmp.eq.s32.totalorder %s19, 0
      %p211 = por %p209, %p210
      %p212 = scmp.ne.s32.totalorder %s201, %s204
      %p213 = scmp.eq.s32.totalorder %s24, 3
      %p214 = por %p212, %p213
      %p215 = scmp.ne.s32.totalorder %s204, %s205
      %p216 = scmp.eq.s32.totalorder %s24, 0
      %p217 = por %p215, %p216
      %p218 = scmp.ne.s32.totalorder %s204, %s205
      %p219 = scmp.eq.s32.totalorder %s25, 3
      %p220 = por %p218, %p219
      %p222 = scmp.ne.s32.totalorder %s205, %s221
      %p223 = scmp.eq.s32.totalorder %s25, 0
      %p224 = por %p222, %p223
      %p225 = scmp.le.s32.totalorder 1, %s19
      %p226 = scmp.lt.s32.totalorder %s19, 5
      %p227 = pnand %p225, %p226
      %p228 = pneg %p227
      // Predicated region
      $region9: #{tpu_custom_call.1} parent=5 // pred_check
        _
      $region10: #{tpu_custom_call.1} parent=5 // pred_check_branch
        %230 = sbr.rel (%p227) target = $region12
      $region11: #{tpu_custom_call.1} parent=5 // pred_region
        %s231 = ssub.s32 %s19, 1
      $region12: #{tpu_custom_call.1} parent=5 // pred_fallthru
        _
      %p232 = scmp.lt.s32.totalorder %s19, 4
      // Predicated region
      $region13: #{tpu_custom_call.1} parent=5 // pred_check
        %p233 = pneg %p232
      $region14: #{tpu_custom_call.1} parent=5 // pred_check_branch
        %235 = sbr.rel (%p233) target = $region16
      $region15: #{tpu_custom_call.1} parent=5 // pred_region
        // Predicated region
        $region17: #{tpu_custom_call.1} parent=15 // pred_check
          %p236 = pneg %p53
        $region18: #{tpu_custom_call.1} parent=15 // pred_check_branch
          %238 = sbr.rel (%p236) target = $region20
        $region19: #{tpu_custom_call.1} parent=15 // pred_region
          %s239 = sand.u32 %s43, 1
          %s240 = scalar_lea.sflag [#allocation4], %s239
          %s241 = sand.u32 %s43, 1
          %s242 = smul.addr %s241, 128
          %s243 = scalar_lea.vmem [#allocation3], %s242
          %s244 = smul.u32 16, %s26
          %246 = vsyncadd %s240, 0
          %s247 = smul.addr %s244, 2
          %s248 = sadd.s32 %s27, %s247
          %s249 = smul.addr %s248, 8
          %s250 = scalar_lea.hbm %s0, %s249
          %s251 = sshll.u32 %s250, 4
          %s252 = int_to_ptr.hbm [resolvable:$true] %s251
          %s253 = sshll.u32 %s243, 4
          %s254 = int_to_ptr.vmem [resolvable:$true] %s253
          %259 = dma.hbm_to_vmem [thread:$0]  %s252, 2048, %s254, %s240, 256, 128, 8
        $region20: #{tpu_custom_call.1} parent=15 // pred_fallthru
          _
        // Predicated region
        $region21: #{tpu_custom_call.1} parent=15 // pred_check
          %p260 = pneg %p79
        $region22: #{tpu_custom_call.1} parent=15 // pred_check_branch
          %262 = sbr.rel (%p260) target = $region24
        $region23: #{tpu_custom_call.1} parent=15 // pred_region
          %s263 = smul.u32 16, %s26
          %p264 = scmp.lt.s32.totalorder %s263, 31
          %s265 = scalar_select %p264, %s263, 31
          %s266 = smul.addr %s265, 4
          %s267 = scalar_lea.vmem %s1, %s266
          %s268 = smul.u32 16, %s26
        $region24: #{tpu_custom_call.1} parent=15 // pred_fallthru
          _
        // Predicated region
        $region25: #{tpu_custom_call.1} parent=15 // pred_check
          %p269 = pneg %p105
        $region26: #{tpu_custom_call.1} parent=15 // pred_check_branch
          %271 = sbr.rel (%p269) target = $region28
        $region27: #{tpu_custom_call.1} parent=15 // pred_region
          %s272 = smul.u32 16, %s27
          %p273 = scmp.lt.s32.totalorder %s272, 31
          %s274 = scalar_select %p273, %s272, 31
          %s275 = smul.addr %s274, 4
          %s276 = scalar_lea.vmem %s2, %s275
          %s277 = smul.u32 16, %s27
        $region28: #{tpu_custom_call.1} parent=15 // pred_fallthru
          _
        // Predicated region
        $region29: #{tpu_custom_call.1} parent=15 // pred_check
          %p278 = pneg %p131
        $region30: #{tpu_custom_call.1} parent=15 // pred_check_branch
          %280 = sbr.rel (%p278) target = $region32
        $region31: #{tpu_custom_call.1} parent=15 // pred_region
          %s281 = smul.u32 16, %s26
          %p282 = scmp.lt.s32.totalorder %s281, 31
          %s283 = scalar_select %p282, %s281, 31
          %s284 = smul.addr %s283, 8
          %s285 = scalar_lea.vmem %s3, %s284
          %s286 = smul.u32 16, %s26
        $region32: #{tpu_custom_call.1} parent=15 // pred_fallthru
          _
        // Predicated region
        $region33: #{tpu_custom_call.1} parent=15 // pred_check
          %p287 = pneg %p157
        $region34: #{tpu_custom_call.1} parent=15 // pred_check_branch
          %289 = sbr.rel (%p287) target = $region36
        $region35: #{tpu_custom_call.1} parent=15 // pred_region
          %p290 = scmp.lt.s32.totalorder %s27, 1
          %s291 = scalar_select %p290, %s27, 1
          %s292 = scalar_lea.vmem %s4, %s291
        $region36: #{tpu_custom_call.1} parent=15 // pred_fallthru
          _
      $region16: #{tpu_custom_call.1} parent=5 // pred_fallthru
        _
      %p293 = scmp.le.s32.totalorder 1, %s19
      %p294 = scmp.lt.s32.totalorder %s19, 5
      %p295 = pnand %p293, %p294
      %p296 = pneg %p295
      // Predicated region
      $region37: #{tpu_custom_call.1} parent=5 // pred_check
        _
      $region38: #{tpu_custom_call.1} parent=5 // pred_check_branch
        %298 = sbr.rel (%p295) target = $region40
      $region39: #{tpu_custom_call.1} parent=5 // pred_region
        %s299 = ssub.s32 %s19, 1
        %s300 = sand.u32 %s46, 1
        %s301 = scalar_lea.sflag [#allocation4], %s300
        %s302 = sand.u32 %s46, 1
        %s303 = smul.addr %s302, 128
        %s304 = scalar_lea.vmem [#allocation3], %s303
        // Predicated region
        $region41: #{tpu_custom_call.1} parent=39 // pred_check
          %p305 = pneg %p59
        $region42: #{tpu_custom_call.1} parent=39 // pred_check_branch
          %307 = sbr.rel (%p305) target = $region44
        $region43: #{tpu_custom_call.1} parent=39 // pred_region
          %309 = dma.done %s301, 2048
        $region44: #{tpu_custom_call.1} parent=39 // pred_fallthru
          _
        %s310 = sand.u32 %s46, 1
        %s311 = scalar_lea.sflag [#allocation4], %s310
        %s312 = sand.u32 %s46, 1
        %s313 = smul.addr %s312, 128
        %s314 = scalar_lea.vmem [#allocation3], %s313
        %p315 = pneg %p59
        %p316 = pneg %p56
        %s317 = smul.u32 16, %s28
        %p318 = scmp.lt.s32.totalorder %s317, 31
        %s319 = scalar_select %p318, %s317, 31
        %s320 = smul.addr %s319, 4
        %s321 = scalar_lea.vmem %s1, %s320
        %p322 = pneg %p85
        %p323 = pneg %p82
        %s324 = smul.u32 16, %s29
        %p325 = scmp.lt.s32.totalorder %s324, 31
        %s326 = scalar_select %p325, %s324, 31
        %s327 = smul.addr %s326, 4
        %s328 = scalar_lea.vmem %s2, %s327
        %p329 = pneg %p111
        %p330 = pneg %p108
        %s331 = smul.u32 16, %s28
        %p332 = scmp.lt.s32.totalorder %s331, 31
        %s333 = scalar_select %p332, %s331, 31
        %s334 = smul.addr %s333, 8
        %s335 = scalar_lea.vmem %s3, %s334
        %p336 = pneg %p137
        %p337 = pneg %p134
        %p338 = scmp.lt.s32.totalorder %s29, 1
        %s339 = scalar_select %p338, %s29, 1
        %s340 = scalar_lea.vmem %s4, %s339
        %p341 = pneg %p163
        %p342 = pneg %p160
        %p343 = pneg %p189
        %p344 = pneg %p186
        %s345 = smul.u32 16, %s28
        %p346 = scmp.lt.s32.totalorder %s345, 31
        %s347 = scalar_select %p346, %s345, 31
        %s348 = smul.addr %s347, 8
        %s349 = scalar_lea.vmem %s5, %s348
        %p350 = pneg %p217
        %p351 = pneg %p214
        %s352 = sand.u32 %s204, 1
        %s353 = scalar_lea.sflag [#allocation5], %s352
        %s354 = sand.u32 %s204, 1
        %s355 = scalar_lea.vmem [#allocation6], %s354
        %s356 = smul.u32 16, %s28
        %s357 = smul.u32 16, %s28
        %p358 = scmp.lt.s32.totalorder %s357, 31
        %s359 = scalar_select %p358, %s357, 31
        %s360 = smul.addr %s359, 4
        %s361 = scalar_lea.vmem %s1, %s360
        %s362 = smul.u32 16, %s28
        %s363 = smul.u32 16, %s29
        %p364 = scmp.lt.s32.totalorder %s363, 31
        %s365 = scalar_select %p364, %s363, 31
        %s366 = smul.addr %s365, 4
        %s367 = scalar_lea.vmem %s2, %s366
        %s368 = smul.u32 16, %s29
        %s369 = smul.u32 16, %s28
        %p370 = scmp.lt.s32.totalorder %s369, 31
        %s371 = scalar_select %p370, %s369, 31
        %s372 = smul.addr %s371, 8
        %s373 = scalar_lea.vmem %s3, %s372
        %s374 = smul.u32 16, %s28
        %p375 = scmp.lt.s32.totalorder %s29, 1
        %s376 = scalar_select %p375, %s29, 1
        %s377 = scalar_lea.vmem %s4, %s376
        %s378 = smul.u32 16, %s28
        %p379 = scmp.lt.s32.totalorder %s378, 31
        %s380 = scalar_select %p379, %s378, 31
        %s381 = smul.addr %s380, 8
        %s382 = scalar_lea.vmem %s5, %s381
        %s383 = smul.u32 16, %s28
        %v384 = vld [vmem:[%s304] sm:$0xff]
        %v385 = vld [vmem:[%s304 + $0x8] sm:$0xff]
        %v386 = vld [vmem:[%s304 + $0x10] sm:$0xff]
        %v387 = vld [vmem:[%s304 + $0x18] sm:$0xff]
        %v388 = vld [vmem:[%s304 + $0x20] sm:$0xff]
        %v389 = vld [vmem:[%s304 + $0x28] sm:$0xff]
        %v390 = vld [vmem:[%s304 + $0x30] sm:$0xff]
        %v391 = vld [vmem:[%s304 + $0x38] sm:$0xff]
        %v392 = vld [vmem:[%s304 + $0x40] sm:$0xff]
        %v393 = vld [vmem:[%s304 + $0x48] sm:$0xff]
        %v394 = vld [vmem:[%s304 + $0x50] sm:$0xff]
        %v395 = vld [vmem:[%s304 + $0x58] sm:$0xff]
        %v396 = vld [vmem:[%s304 + $0x60] sm:$0xff]
        %v397 = vld [vmem:[%s304 + $0x68] sm:$0xff]
        %v398 = vld [vmem:[%s304 + $0x70] sm:$0xff]
        %v399 = vld [vmem:[%s304 + $0x78] sm:$0xff]
        %v400 = vmul.f32 %v384, 0.6
        %v401 = vmul.f32 %v385, 0.6
        %v402 = vmul.f32 %v386, 0.6
        %v403 = vmul.f32 %v387, 0.6
        %v404 = vmul.f32 %v388, 0.6
        %v405 = vmul.f32 %v389, 0.6
        %v406 = vmul.f32 %v390, 0.6
        %v407 = vmul.f32 %v391, 0.6
        %v408 = vmul.f32 %v392, 0.6
        %v409 = vmul.f32 %v393, 0.6
        %v410 = vmul.f32 %v394, 0.6
        %v411 = vmul.f32 %v395, 0.6
        %v412 = vmul.f32 %v396, 0.6
        %v413 = vmul.f32 %v397, 0.6
        %v414 = vmul.f32 %v398, 0.6
        %v415 = vmul.f32 %v399, 0.6
        %v416 = vld [vmem:[%s361] sm:$0xf]
        %v417 = vld [vmem:[%s361 + $0x4] sm:$0xf]
        %v418 = vld [vmem:[%s361 + $0x8] sm:$0xf]
        %v419 = vld [vmem:[%s361 + $0xc] sm:$0xf]
        %v420 = vld [vmem:[%s361 + $0x10] sm:$0xf]
        %v421 = vld [vmem:[%s361 + $0x14] sm:$0xf]
        %v422 = vld [vmem:[%s361 + $0x18] sm:$0xf]
        %v423 = vld [vmem:[%s361 + $0x1c] sm:$0xf]
        %v424 = vld [vmem:[%s361 + $0x20] sm:$0xf]
        %v425 = vld [vmem:[%s361 + $0x24] sm:$0xf]
        %v426 = vld [vmem:[%s361 + $0x28] sm:$0xf]
        %v427 = vld [vmem:[%s361 + $0x2c] sm:$0xf]
        %v428 = vld [vmem:[%s361 + $0x30] sm:$0xf]
        %v429 = vld [vmem:[%s361 + $0x34] sm:$0xf]
        %v430 = vld [vmem:[%s361 + $0x38] sm:$0xf]
        %v431 = vld [vmem:[%s361 + $0x3c] sm:$0xf]
        %v432 = vld [vmem:[%s367] sm:$0xf]
        %v433 = vld [vmem:[%s367 + $0x4] sm:$0xf]
        %v434 = vld [vmem:[%s367 + $0x8] sm:$0xf]
        %v435 = vld [vmem:[%s367 + $0xc] sm:$0xf]
        %v436 = vld [vmem:[%s367 + $0x10] sm:$0xf]
        %v437 = vld [vmem:[%s367 + $0x14] sm:$0xf]
        %v438 = vld [vmem:[%s367 + $0x18] sm:$0xf]
        %v439 = vld [vmem:[%s367 + $0x1c] sm:$0xf]
        %v440 = vld [vmem:[%s367 + $0x20] sm:$0xf]
        %v441 = vld [vmem:[%s367 + $0x24] sm:$0xf]
        %v442 = vld [vmem:[%s367 + $0x28] sm:$0xf]
        %v443 = vld [vmem:[%s367 + $0x2c] sm:$0xf]
        %v444 = vld [vmem:[%s367 + $0x30] sm:$0xf]
        %v445 = vld [vmem:[%s367 + $0x34] sm:$0xf]
        %v446 = vld [vmem:[%s367 + $0x38] sm:$0xf]
        %v447 = vld [vmem:[%s367 + $0x3c] sm:$0xf]
        %v464 = vunpack.c.l.b16 %v416
        %v465 = vunpack.c.l.b16 %v417
        %v466 = vunpack.c.l.b16 %v418
        %v467 = vunpack.c.l.b16 %v419
        %v468 = vunpack.c.l.b16 %v420
        %v469 = vunpack.c.l.b16 %v421
        %v470 = vunpack.c.l.b16 %v422
        %v471 = vunpack.c.l.b16 %v423
        %v472 = vunpack.c.l.b16 %v424
        %v473 = vunpack.c.l.b16 %v425
        %v474 = vunpack.c.l.b16 %v426
        %v475 = vunpack.c.l.b16 %v427
        %v476 = vunpack.c.l.b16 %v428
        %v477 = vunpack.c.l.b16 %v429
        %v478 = vunpack.c.l.b16 %v430
        %v479 = vunpack.c.l.b16 %v431
        %v480 = vpack.c.b16 %v465, %v464
        %v481 = vpack.c.b16 %v467, %v466
        %v482 = vpack.c.b16 %v469, %v468
        %v483 = vpack.c.b16 %v471, %v470
        %v484 = vpack.c.b16 %v473, %v472
        %v485 = vpack.c.b16 %v475, %v474
        %v486 = vpack.c.b16 %v477, %v476
        %v487 = vpack.c.b16 %v479, %v478
        %v504 = vunpack.c.l.b16 %v432
        %v505 = vunpack.c.l.b16 %v433
        %v506 = vunpack.c.l.b16 %v434
        %v507 = vunpack.c.l.b16 %v435
        %v508 = vunpack.c.l.b16 %v436
        %v509 = vunpack.c.l.b16 %v437
        %v510 = vunpack.c.l.b16 %v438
        %v511 = vunpack.c.l.b16 %v439
        %v512 = vunpack.c.l.b16 %v440
        %v513 = vunpack.c.l.b16 %v441
        %v514 = vunpack.c.l.b16 %v442
        %v515 = vunpack.c.l.b16 %v443
        %v516 = vunpack.c.l.b16 %v444
        %v517 = vunpack.c.l.b16 %v445
        %v518 = vunpack.c.l.b16 %v446
        %v519 = vunpack.c.l.b16 %v447
        %v520 = vpack.c.b16 %v505, %v504
        %v521 = vpack.c.b16 %v507, %v506
        %v522 = vpack.c.b16 %v509, %v508
        %v523 = vpack.c.b16 %v511, %v510
        %v524 = vpack.c.b16 %v513, %v512
        %v525 = vpack.c.b16 %v515, %v514
        %v526 = vpack.c.b16 %v517, %v516
        %v527 = vpack.c.b16 %v519, %v518
        %vm528 = vcmask 523264
        %v530 = vsel %vm528, %v480, 0
        %v533 = vsel %vm528, %v481, 0
        %v536 = vsel %vm528, %v482, 0
        %v539 = vsel %vm528, %v483, 0
        %v542 = vsel %vm528, %v484, 0
        %v545 = vsel %vm528, %v485, 0
        %v548 = vsel %vm528, %v486, 0
        %v551 = vsel %vm528, %v487, 0
        %v554 = vsel %vm528, %v520, 0
        %v557 = vsel %vm528, %v521, 0
        %v560 = vsel %vm528, %v522, 0
        %v563 = vsel %vm528, %v523, 0
        %v566 = vsel %vm528, %v524, 0
        %v569 = vsel %vm528, %v525, 0
        %v572 = vsel %vm528, %v526, 0
        %v575 = vsel %vm528, %v527, 0
        %577 = vmatpush.bf16.xpose.msra.mxu0 %v575
        %578 = vmatpush.bf16.xpose.msra.mxu0 %v572
        %579 = vmatpush.bf16.xpose.msra.mxu0 %v569
        %580 = vmatpush.bf16.xpose.msra.mxu0 %v566
        %581 = vmatpush.bf16.xpose.msra.mxu0 %v563
        %582 = vmatpush.bf16.xpose.msra.mxu0 %v560
        %583 = vmatpush.bf16.xpose.msra.mxu0 %v557
        %584 = vmatpush.bf16.xpose.msra.mxu0 %v554
        %585 = vmatmul.bf16.gmra.mxu0 %v530
        %v586 = vpop.f32.mrf.mxu0
        %v587 = vadd.f32 0.0, %v586
        %v588 = vpop.f32.mrf.mxu0
        %v589 = vadd.f32 0.0, %v588
        %590 = vmatmul.bf16.gmra.mxu0 %v533
        %v591 = vpop.f32.mrf.mxu0
        %v592 = vadd.f32 0.0, %v591
        %v593 = vpop.f32.mrf.mxu0
        %v594 = vadd.f32 0.0, %v593
        %595 = vmatmul.bf16.gmra.mxu0 %v536
        %v596 = vpop.f32.mrf.mxu0
        %v597 = vadd.f32 0.0, %v596
        %v598 = vpop.f32.mrf.mxu0
        %v599 = vadd.f32 0.0, %v598
        %600 = vmatmul.bf16.gmra.mxu0 %v539
        %v601 = vpop.f32.mrf.mxu0
        %v602 = vadd.f32 0.0, %v601
        %v603 = vpop.f32.mrf.mxu0
        %v604 = vadd.f32 0.0, %v603
        %605 = vmatmul.bf16.gmra.mxu0 %v542
        %v606 = vpop.f32.mrf.mxu0
        %v607 = vadd.f32 0.0, %v606
        %v608 = vpop.f32.mrf.mxu0
        %v609 = vadd.f32 0.0, %v608
        %610 = vmatmul.bf16.gmra.mxu0 %v545
        %v611 = vpop.f32.mrf.mxu0
        %v612 = vadd.f32 0.0, %v611
        %v613 = vpop.f32.mrf.mxu0
        %v614 = vadd.f32 0.0, %v613
        %615 = vmatmul.bf16.gmra.mxu0 %v548
        %v616 = vpop.f32.mrf.mxu0
        %v617 = vadd.f32 0.0, %v616
        %v618 = vpop.f32.mrf.mxu0
        %v619 = vadd.f32 0.0, %v618
        %620 = vmatmul.bf16.gmra.mxu0 %v551
        %v621 = vpop.f32.mrf.mxu0
        %v622 = vadd.f32 0.0, %v621
        %v623 = vpop.f32.mrf.mxu0
        %v624 = vadd.f32 0.0, %v623
        %625 = vdwg.mxu0
        %v626 = vadd.f32 %v400, %v587
        %v627 = vadd.f32 %v401, %v589
        %v628 = vadd.f32 %v402, %v592
        %v629 = vadd.f32 %v403, %v594
        %v630 = vadd.f32 %v404, %v597
        %v631 = vadd.f32 %v405, %v599
        %v632 = vadd.f32 %v406, %v602
        %v633 = vadd.f32 %v407, %v604
        %v634 = vadd.f32 %v408, %v607
        %v635 = vadd.f32 %v409, %v609
        %v636 = vadd.f32 %v410, %v612
        %v637 = vadd.f32 %v411, %v614
        %v638 = vadd.f32 %v412, %v617
        %v639 = vadd.f32 %v413, %v619
        %v640 = vadd.f32 %v414, %v622
        %v641 = vadd.f32 %v415, %v624
        %v642 = vld [vmem:[%s373] sm:$0xff]
        %v643 = vld [vmem:[%s373 + $0x8] sm:$0xff]
        %v644 = vld [vmem:[%s373 + $0x10] sm:$0xff]
        %v645 = vld [vmem:[%s373 + $0x18] sm:$0xff]
        %v646 = vld [vmem:[%s373 + $0x20] sm:$0xff]
        %v647 = vld [vmem:[%s373 + $0x28] sm:$0xff]
        %v648 = vld [vmem:[%s373 + $0x30] sm:$0xff]
        %v649 = vld [vmem:[%s373 + $0x38] sm:$0xff]
        %v650 = vld [vmem:[%s373 + $0x40] sm:$0xff]
        %v651 = vld [vmem:[%s373 + $0x48] sm:$0xff]
        %v652 = vld [vmem:[%s373 + $0x50] sm:$0xff]
        %v653 = vld [vmem:[%s373 + $0x58] sm:$0xff]
        %v654 = vld [vmem:[%s373 + $0x60] sm:$0xff]
        %v655 = vld [vmem:[%s373 + $0x68] sm:$0xff]
        %v656 = vld [vmem:[%s373 + $0x70] sm:$0xff]
        %v657 = vld [vmem:[%s373 + $0x78] sm:$0xff]
        %v658 = vld [vmem:[%s377] sm:$0x1]
        %p659 = scmp.eq.s32.totalorder %s28, %s29
        // Predicated region
        $region45: #{tpu_custom_call.1} parent=39 // pred_check
          %p660 = pneg %p659
        $region46: #{tpu_custom_call.1} parent=39 // pred_check_branch
          %662 = sbr.rel (%p660) target = $region48
        $region47: #{tpu_custom_call.1} parent=39 // pred_region
          %v663 = vlaneseq
          %v664 = vshrl.u32 %v663, 7
          %v665 = vadd.s32 %v664, 8
          %v666 = vadd.s32 %v664, 16
          %v667 = vadd.s32 %v664, 24
          %v668 = vadd.s32 %v664, 32
          %v669 = vadd.s32 %v664, 40
          %v670 = vadd.s32 %v664, 48
          %v671 = vadd.s32 %v664, 56
          %v672 = vadd.s32 %v664, 64
          %v673 = vadd.s32 %v664, 72
          %v674 = vadd.s32 %v664, 80
          %v675 = vadd.s32 %v664, 88
          %v676 = vadd.s32 %v664, 96
          %v677 = vadd.s32 %v664, 104
          %v678 = vadd.s32 %v664, 112
          %v679 = vadd.s32 %v664, 120
          %v680 = vlaneseq
          %v681 = vand.u32 %v680, 127
          %vm682 = vcmp.eq.s32.totalorder %v664, %v681
          %vm683 = vcmp.eq.s32.totalorder %v665, %v681
          %vm684 = vcmp.eq.s32.totalorder %v666, %v681
          %vm685 = vcmp.eq.s32.totalorder %v667, %v681
          %vm686 = vcmp.eq.s32.totalorder %v668, %v681
          %vm687 = vcmp.eq.s32.totalorder %v669, %v681
          %vm688 = vcmp.eq.s32.totalorder %v670, %v681
          %vm689 = vcmp.eq.s32.totalorder %v671, %v681
          %vm690 = vcmp.eq.s32.totalorder %v672, %v681
          %vm691 = vcmp.eq.s32.totalorder %v673, %v681
          %vm692 = vcmp.eq.s32.totalorder %v674, %v681
          %vm693 = vcmp.eq.s32.totalorder %v675, %v681
          %vm694 = vcmp.eq.s32.totalorder %v676, %v681
          %vm695 = vcmp.eq.s32.totalorder %v677, %v681
          %vm696 = vcmp.eq.s32.totalorder %v678, %v681
          %vm697 = vcmp.eq.s32.totalorder %v679, %v681
          %v698 = vsel %vm682, -1e+30, %v626
          %v699 = vsel %vm683, -1e+30, %v627
          %v700 = vsel %vm684, -1e+30, %v628
          %v701 = vsel %vm685, -1e+30, %v629
          %v702 = vsel %vm686, -1e+30, %v630
          %v703 = vsel %vm687, -1e+30, %v631
          %v704 = vsel %vm688, -1e+30, %v632
          %v705 = vsel %vm689, -1e+30, %v633
          %v706 = vsel %vm690, -1e+30, %v634
          %v707 = vsel %vm691, -1e+30, %v635
          %v708 = vsel %vm692, -1e+30, %v636
          %v709 = vsel %vm693, -1e+30, %v637
          %v710 = vsel %vm694, -1e+30, %v638
          %v711 = vsel %vm695, -1e+30, %v639
          %v712 = vsel %vm696, -1e+30, %v640
          %v713 = vsel %vm697, -1e+30, %v641
          %715 = vset.pattern.permute.xlu0 0
          %716 = vperm.xlu0 %715, %v642
          %v717 = vpop.permute.xlu0 %716
          %720 = vset.pattern.permute.xlu0 0
          %721 = vperm.xlu0 %720, %v643
          %v722 = vpop.permute.xlu0 %721
          %725 = vset.pattern.permute.xlu0 0
          %726 = vperm.xlu0 %725, %v644
          %v727 = vpop.permute.xlu0 %726
          %730 = vset.pattern.permute.xlu0 0
          %731 = vperm.xlu0 %730, %v645
          %v732 = vpop.permute.xlu0 %731
          %735 = vset.pattern.permute.xlu0 0
          %736 = vperm.xlu0 %735, %v646
          %v737 = vpop.permute.xlu0 %736
          %740 = vset.pattern.permute.xlu0 0
          %741 = vperm.xlu0 %740, %v647
          %v742 = vpop.permute.xlu0 %741
          %745 = vset.pattern.permute.xlu0 0
          %746 = vperm.xlu0 %745, %v648
          %v747 = vpop.permute.xlu0 %746
          %750 = vset.pattern.permute.xlu0 0
          %751 = vperm.xlu0 %750, %v649
          %v752 = vpop.permute.xlu0 %751
          %755 = vset.pattern.permute.xlu0 0
          %756 = vperm.xlu0 %755, %v650
          %v757 = vpop.permute.xlu0 %756
          %760 = vset.pattern.permute.xlu0 0
          %761 = vperm.xlu0 %760, %v651
          %v762 = vpop.permute.xlu0 %761
          %765 = vset.pattern.permute.xlu0 0
          %766 = vperm.xlu0 %765, %v652
          %v767 = vpop.permute.xlu0 %766
          %770 = vset.pattern.permute.xlu0 0
          %771 = vperm.xlu0 %770, %v653
          %v772 = vpop.permute.xlu0 %771
          %775 = vset.pattern.permute.xlu0 0
          %776 = vperm.xlu0 %775, %v654
          %v777 = vpop.permute.xlu0 %776
          %780 = vset.pattern.permute.xlu0 0
          %781 = vperm.xlu0 %780, %v655
          %v782 = vpop.permute.xlu0 %781
          %785 = vset.pattern.permute.xlu0 0
          %786 = vperm.xlu0 %785, %v656
          %v787 = vpop.permute.xlu0 %786
          %790 = vset.pattern.permute.xlu0 0
          %791 = vperm.xlu0 %790, %v657
          %v792 = vpop.permute.xlu0 %791
          %v794 = vsub.f32 %v698, %v717
          %v795 = vsub.f32 %v699, %v722
          %v796 = vsub.f32 %v700, %v727
          %v797 = vsub.f32 %v701, %v732
          %v798 = vsub.f32 %v702, %v737
          %v799 = vsub.f32 %v703, %v742
          %v800 = vsub.f32 %v704, %v747
          %v801 = vsub.f32 %v705, %v752
          %v802 = vsub.f32 %v706, %v757
          %v803 = vsub.f32 %v707, %v762
          %v804 = vsub.f32 %v708, %v767
          %v805 = vsub.f32 %v709, %v772
          %v806 = vsub.f32 %v710, %v777
          %v807 = vsub.f32 %v711, %v782
          %v808 = vsub.f32 %v712, %v787
          %v809 = vsub.f32 %v713, %v792
          %v810 = vmax.f32 %v794, 0.0
          %v811 = vmax.f32 %v795, 0.0
          %v812 = vmax.f32 %v796, 0.0
          %v813 = vmax.f32 %v797, 0.0
          %v814 = vmax.f32 %v798, 0.0
          %v815 = vmax.f32 %v799, 0.0
          %v816 = vmax.f32 %v800, 0.0
          %v817 = vmax.f32 %v801, 0.0
          %v818 = vmax.f32 %v802, 0.0
          %v819 = vmax.f32 %v803, 0.0
          %v820 = vmax.f32 %v804, 0.0
          %v821 = vmax.f32 %v805, 0.0
          %v822 = vmax.f32 %v806, 0.0
          %v823 = vmax.f32 %v807, 0.0
          %v824 = vmax.f32 %v808, 0.0
          %v825 = vmax.f32 %v809, 0.0
          %826 = vmax.xlane.f32.xlu0 %v810
          %v827 = vpop.xlane.xlu0 %826
          %828 = vmax.xlane.f32.xlu0 %v811
          %v829 = vpop.xlane.xlu0 %828
          %830 = vmax.xlane.f32.xlu0 %v812
          %v831 = vpop.xlane.xlu0 %830
          %832 = vmax.xlane.f32.xlu0 %v813
          %v833 = vpop.xlane.xlu0 %832
          %834 = vmax.xlane.f32.xlu0 %v814
          %v835 = vpop.xlane.xlu0 %834
          %836 = vmax.xlane.f32.xlu0 %v815
          %v837 = vpop.xlane.xlu0 %836
          %838 = vmax.xlane.f32.xlu0 %v816
          %v839 = vpop.xlane.xlu0 %838
          %840 = vmax.xlane.f32.xlu0 %v817
          %v841 = vpop.xlane.xlu0 %840
          %842 = vmax.xlane.f32.xlu0 %v818
          %v843 = vpop.xlane.xlu0 %842
          %844 = vmax.xlane.f32.xlu0 %v819
          %v845 = vpop.xlane.xlu0 %844
          %846 = vmax.xlane.f32.xlu0 %v820
          %v847 = vpop.xlane.xlu0 %846
          %848 = vmax.xlane.f32.xlu0 %v821
          %v849 = vpop.xlane.xlu0 %848
          %850 = vmax.xlane.f32.xlu0 %v822
          %v851 = vpop.xlane.xlu0 %850
          %852 = vmax.xlane.f32.xlu0 %v823
          %v853 = vpop.xlane.xlu0 %852
          %854 = vmax.xlane.f32.xlu0 %v824
          %v855 = vpop.xlane.xlu0 %854
          %856 = vmax.xlane.f32.xlu0 %v825
          %v857 = vpop.xlane.xlu0 %856
          %vm858 = vcmask 7168
          %859 = vst.msk [vmem:[#allocation2] sm:$0xff] %vm858, %v827
          %860 = vst.msk [vmem:[#allocation2 + $0x8] sm:$0xff] %vm858, %v829
          %861 = vst.msk [vmem:[#allocation2 + $0x10] sm:$0xff] %vm858, %v831
          %862 = vst.msk [vmem:[#allocation2 + $0x18] sm:$0xff] %vm858, %v833
          %863 = vst.msk [vmem:[#allocation2 + $0x20] sm:$0xff] %vm858, %v835
          %864 = vst.msk [vmem:[#allocation2 + $0x28] sm:$0xff] %vm858, %v837
          %865 = vst.msk [vmem:[#allocation2 + $0x30] sm:$0xff] %vm858, %v839
          %866 = vst.msk [vmem:[#allocation2 + $0x38] sm:$0xff] %vm858, %v841
          %867 = vst.msk [vmem:[#allocation2 + $0x40] sm:$0xff] %vm858, %v843
          %868 = vst.msk [vmem:[#allocation2 + $0x48] sm:$0xff] %vm858, %v845
          %869 = vst.msk [vmem:[#allocation2 + $0x50] sm:$0xff] %vm858, %v847
          %870 = vst.msk [vmem:[#allocation2 + $0x58] sm:$0xff] %vm858, %v849
          %871 = vst.msk [vmem:[#allocation2 + $0x60] sm:$0xff] %vm858, %v851
          %872 = vst.msk [vmem:[#allocation2 + $0x68] sm:$0xff] %vm858, %v853
          %873 = vst.msk [vmem:[#allocation2 + $0x70] sm:$0xff] %vm858, %v855
          %874 = vst.msk [vmem:[#allocation2 + $0x78] sm:$0xff] %vm858, %v857
          %v876 = vperm.slane %v658, 0
          %v878 = vsub.f32 %v698, %v876
          %v879 = vsub.f32 %v699, %v876
          %v880 = vsub.f32 %v700, %v876
          %v881 = vsub.f32 %v701, %v876
          %v882 = vsub.f32 %v702, %v876
          %v883 = vsub.f32 %v703, %v876
          %v884 = vsub.f32 %v704, %v876
          %v885 = vsub.f32 %v705, %v876
          %v886 = vsub.f32 %v706, %v876
          %v887 = vsub.f32 %v707, %v876
          %v888 = vsub.f32 %v708, %v876
          %v889 = vsub.f32 %v709, %v876
          %v890 = vsub.f32 %v710, %v876
          %v891 = vsub.f32 %v711, %v876
          %v892 = vsub.f32 %v712, %v876
          %v893 = vsub.f32 %v713, %v876
          %v894 = vmax.f32 %v878, 0.0
          %v895 = vmax.f32 %v879, 0.0
          %v896 = vmax.f32 %v880, 0.0
          %v897 = vmax.f32 %v881, 0.0
          %v898 = vmax.f32 %v882, 0.0
          %v899 = vmax.f32 %v883, 0.0
          %v900 = vmax.f32 %v884, 0.0
          %v901 = vmax.f32 %v885, 0.0
          %v902 = vmax.f32 %v886, 0.0
          %v903 = vmax.f32 %v887, 0.0
          %v904 = vmax.f32 %v888, 0.0
          %v905 = vmax.f32 %v889, 0.0
          %v906 = vmax.f32 %v890, 0.0
          %v907 = vmax.f32 %v891, 0.0
          %v908 = vmax.f32 %v892, 0.0
          %v909 = vmax.f32 %v893, 0.0
          %v910 = vmax.f32 %v894, %v898
          %v911 = vmax.f32 %v895, %v899
          %v912 = vmax.f32 %v896, %v900
          %v913 = vmax.f32 %v897, %v901
          %v914 = vmax.f32 %v910, %v902
          %v915 = vmax.f32 %v911, %v903
          %v916 = vmax.f32 %v912, %v904
          %v917 = vmax.f32 %v913, %v905
          %v918 = vmax.f32 %v914, %v906
          %v919 = vmax.f32 %v915, %v907
          %v920 = vmax.f32 %v916, %v908
          %v921 = vmax.f32 %v917, %v909
          %v922 = vmax.f32 %v918, %v919
          %v923 = vmax.f32 %v920, %v921
          %v924 = vmax.f32 %v922, %v923
          %v925 = vrot.slane %v924, 4
          %v926 = vmax.f32 %v924, %v925
          %v927 = vrot.slane %v926, 2
          %v928 = vmax.f32 %v926, %v927
          %v929 = vrot.slane %v928, 1
          %v930 = vmax.f32 %v928, %v929
          %931 = vst [vmem:[%s355] sm:$0x1] %v930
        $region48: #{tpu_custom_call.1} parent=39 // pred_fallthru
          _
        %p932 = scmp.ne.s32.totalorder %s28, %s29
        // Predicated region
        $region49: #{tpu_custom_call.1} parent=39 // pred_check
          %p933 = pneg %p932
        $region50: #{tpu_custom_call.1} parent=39 // pred_check_branch
          %935 = sbr.rel (%p933) target = $region52
        $region51: #{tpu_custom_call.1} parent=39 // pred_region
          %937 = vset.pattern.permute.xlu0 0
          %938 = vperm.xlu0 %937, %v642
          %v939 = vpop.permute.xlu0 %938
          %942 = vset.pattern.permute.xlu0 0
          %943 = vperm.xlu0 %942, %v643
          %v944 = vpop.permute.xlu0 %943
          %947 = vset.pattern.permute.xlu0 0
          %948 = vperm.xlu0 %947, %v644
          %v949 = vpop.permute.xlu0 %948
          %952 = vset.pattern.permute.xlu0 0
          %953 = vperm.xlu0 %952, %v645
          %v954 = vpop.permute.xlu0 %953
          %957 = vset.pattern.permute.xlu0 0
          %958 = vperm.xlu0 %957, %v646
          %v959 = vpop.permute.xlu0 %958
          %962 = vset.pattern.permute.xlu0 0
          %963 = vperm.xlu0 %962, %v647
          %v964 = vpop.permute.xlu0 %963
          %967 = vset.pattern.permute.xlu0 0
          %968 = vperm.xlu0 %967, %v648
          %v969 = vpop.permute.xlu0 %968
          %972 = vset.pattern.permute.xlu0 0
          %973 = vperm.xlu0 %972, %v649
          %v974 = vpop.permute.xlu0 %973
          %977 = vset.pattern.permute.xlu0 0
          %978 = vperm.xlu0 %977, %v650
          %v979 = vpop.permute.xlu0 %978
          %982 = vset.pattern.permute.xlu0 0
          %983 = vperm.xlu0 %982, %v651
          %v984 = vpop.permute.xlu0 %983
          %987 = vset.pattern.permute.xlu0 0
          %988 = vperm.xlu0 %987, %v652
          %v989 = vpop.permute.xlu0 %988
          %992 = vset.pattern.permute.xlu0 0
          %993 = vperm.xlu0 %992, %v653
          %v994 = vpop.permute.xlu0 %993
          %997 = vset.pattern.permute.xlu0 0
          %998 = vperm.xlu0 %997, %v654
          %v999 = vpop.permute.xlu0 %998
          %1002 = vset.pattern.permute.xlu0 0
          %1003 = vperm.xlu0 %1002, %v655
          %v1004 = vpop.permute.xlu0 %1003
          %1007 = vset.pattern.permute.xlu0 0
          %1008 = vperm.xlu0 %1007, %v656
          %v1009 = vpop.permute.xlu0 %1008
          %1012 = vset.pattern.permute.xlu0 0
          %1013 = vperm.xlu0 %1012, %v657
          %v1014 = vpop.permute.xlu0 %1013
          %v1016 = vsub.f32 %v626, %v939
          %v1017 = vsub.f32 %v627, %v944
          %v1018 = vsub.f32 %v628, %v949
          %v1019 = vsub.f32 %v629, %v954
          %v1020 = vsub.f32 %v630, %v959
          %v1021 = vsub.f32 %v631, %v964
          %v1022 = vsub.f32 %v632, %v969
          %v1023 = vsub.f32 %v633, %v974
          %v1024 = vsub.f32 %v634, %v979
          %v1025 = vsub.f32 %v635, %v984
          %v1026 = vsub.f32 %v636, %v989
          %v1027 = vsub.f32 %v637, %v994
          %v1028 = vsub.f32 %v638, %v999
          %v1029 = vsub.f32 %v639, %v1004
          %v1030 = vsub.f32 %v640, %v1009
          %v1031 = vsub.f32 %v641, %v1014
          %v1032 = vmax.f32 %v1016, 0.0
          %v1033 = vmax.f32 %v1017, 0.0
          %v1034 = vmax.f32 %v1018, 0.0
          %v1035 = vmax.f32 %v1019, 0.0
          %v1036 = vmax.f32 %v1020, 0.0
          %v1037 = vmax.f32 %v1021, 0.0
          %v1038 = vmax.f32 %v1022, 0.0
          %v1039 = vmax.f32 %v1023, 0.0
          %v1040 = vmax.f32 %v1024, 0.0
          %v1041 = vmax.f32 %v1025, 0.0
          %v1042 = vmax.f32 %v1026, 0.0
          %v1043 = vmax.f32 %v1027, 0.0
          %v1044 = vmax.f32 %v1028, 0.0
          %v1045 = vmax.f32 %v1029, 0.0
          %v1046 = vmax.f32 %v1030, 0.0
          %v1047 = vmax.f32 %v1031, 0.0
          %1048 = vmax.xlane.f32.xlu0 %v1032
          %v1049 = vpop.xlane.xlu0 %1048
          %1050 = vmax.xlane.f32.xlu0 %v1033
          %v1051 = vpop.xlane.xlu0 %1050
          %1052 = vmax.xlane.f32.xlu0 %v1034
          %v1053 = vpop.xlane.xlu0 %1052
          %1054 = vmax.xlane.f32.xlu0 %v1035
          %v1055 = vpop.xlane.xlu0 %1054
          %1056 = vmax.xlane.f32.xlu0 %v1036
          %v1057 = vpop.xlane.xlu0 %1056
          %1058 = vmax.xlane.f32.xlu0 %v1037
          %v1059 = vpop.xlane.xlu0 %1058
          %1060 = vmax.xlane.f32.xlu0 %v1038
          %v1061 = vpop.xlane.xlu0 %1060
          %1062 = vmax.xlane.f32.xlu0 %v1039
          %v1063 = vpop.xlane.xlu0 %1062
          %1064 = vmax.xlane.f32.xlu0 %v1040
          %v1065 = vpop.xlane.xlu0 %1064
          %1066 = vmax.xlane.f32.xlu0 %v1041
          %v1067 = vpop.xlane.xlu0 %1066
          %1068 = vmax.xlane.f32.xlu0 %v1042
          %v1069 = vpop.xlane.xlu0 %1068
          %1070 = vmax.xlane.f32.xlu0 %v1043
          %v1071 = vpop.xlane.xlu0 %1070
          %1072 = vmax.xlane.f32.xlu0 %v1044
          %v1073 = vpop.xlane.xlu0 %1072
          %1074 = vmax.xlane.f32.xlu0 %v1045
          %v1075 = vpop.xlane.xlu0 %1074
          %1076 = vmax.xlane.f32.xlu0 %v1046
          %v1077 = vpop.xlane.xlu0 %1076
          %1078 = vmax.xlane.f32.xlu0 %v1047
          %v1079 = vpop.xlane.xlu0 %1078
          %vm1080 = vcmask 7168
          %1081 = vst.msk [vmem:[#allocation2] sm:$0xff] %vm1080, %v1049
          %1082 = vst.msk [vmem:[#allocation2 + $0x8] sm:$0xff] %vm1080, %v1051
          %1083 = vst.msk [vmem:[#allocation2 + $0x10] sm:$0xff] %vm1080, %v1053
          %1084 = vst.msk [vmem:[#allocation2 + $0x18] sm:$0xff] %vm1080, %v1055
          %1085 = vst.msk [vmem:[#allocation2 + $0x20] sm:$0xff] %vm1080, %v1057
          %1086 = vst.msk [vmem:[#allocation2 + $0x28] sm:$0xff] %vm1080, %v1059
          %1087 = vst.msk [vmem:[#allocation2 + $0x30] sm:$0xff] %vm1080, %v1061
          %1088 = vst.msk [vmem:[#allocation2 + $0x38] sm:$0xff] %vm1080, %v1063
          %1089 = vst.msk [vmem:[#allocation2 + $0x40] sm:$0xff] %vm1080, %v1065
          %1090 = vst.msk [vmem:[#allocation2 + $0x48] sm:$0xff] %vm1080, %v1067
          %1091 = vst.msk [vmem:[#allocation2 + $0x50] sm:$0xff] %vm1080, %v1069
          %1092 = vst.msk [vmem:[#allocation2 + $0x58] sm:$0xff] %vm1080, %v1071
          %1093 = vst.msk [vmem:[#allocation2 + $0x60] sm:$0xff] %vm1080, %v1073
          %1094 = vst.msk [vmem:[#allocation2 + $0x68] sm:$0xff] %vm1080, %v1075
          %1095 = vst.msk [vmem:[#allocation2 + $0x70] sm:$0xff] %vm1080, %v1077
          %1096 = vst.msk [vmem:[#allocation2 + $0x78] sm:$0xff] %vm1080, %v1079
          %v1098 = vperm.slane %v658, 0
          %v1100 = vsub.f32 %v626, %v1098
          %v1101 = vsub.f32 %v627, %v1098
          %v1102 = vsub.f32 %v628, %v1098
          %v1103 = vsub.f32 %v629, %v1098
          %v1104 = vsub.f32 %v630, %v1098
          %v1105 = vsub.f32 %v631, %v1098
          %v1106 = vsub.f32 %v632, %v1098
          %v1107 = vsub.f32 %v633, %v1098
          %v1108 = vsub.f32 %v634, %v1098
          %v1109 = vsub.f32 %v635, %v1098
          %v1110 = vsub.f32 %v636, %v1098
          %v1111 = vsub.f32 %v637, %v1098
          %v1112 = vsub.f32 %v638, %v1098
          %v1113 = vsub.f32 %v639, %v1098
          %v1114 = vsub.f32 %v640, %v1098
          %v1115 = vsub.f32 %v641, %v1098
          %v1116 = vmax.f32 %v1100, 0.0
          %v1117 = vmax.f32 %v1101, 0.0
          %v1118 = vmax.f32 %v1102, 0.0
          %v1119 = vmax.f32 %v1103, 0.0
          %v1120 = vmax.f32 %v1104, 0.0
          %v1121 = vmax.f32 %v1105, 0.0
          %v1122 = vmax.f32 %v1106, 0.0
          %v1123 = vmax.f32 %v1107, 0.0
          %v1124 = vmax.f32 %v1108, 0.0
          %v1125 = vmax.f32 %v1109, 0.0
          %v1126 = vmax.f32 %v1110, 0.0
          %v1127 = vmax.f32 %v1111, 0.0
          %v1128 = vmax.f32 %v1112, 0.0
          %v1129 = vmax.f32 %v1113, 0.0
          %v1130 = vmax.f32 %v1114, 0.0
          %v1131 = vmax.f32 %v1115, 0.0
          %v1132 = vmax.f32 %v1116, %v1120
          %v1133 = vmax.f32 %v1117, %v1121
          %v1134 = vmax.f32 %v1118, %v1122
          %v1135 = vmax.f32 %v1119, %v1123
          %v1136 = vmax.f32 %v1132, %v1124
          %v1137 = vmax.f32 %v1133, %v1125
          %v1138 = vmax.f32 %v1134, %v1126
          %v1139 = vmax.f32 %v1135, %v1127
          %v1140 = vmax.f32 %v1136, %v1128
          %v1141 = vmax.f32 %v1137, %v1129
          %v1142 = vmax.f32 %v1138, %v1130
          %v1143 = vmax.f32 %v1139, %v1131
          %v1144 = vmax.f32 %v1140, %v1141
          %v1145 = vmax.f32 %v1142, %v1143
          %v1146 = vmax.f32 %v1144, %v1145
          %v1147 = vrot.slane %v1146, 4
          %v1148 = vmax.f32 %v1146, %v1147
          %v1149 = vrot.slane %v1148, 2
          %v1150 = vmax.f32 %v1148, %v1149
          %v1151 = vrot.slane %v1150, 1
          %v1152 = vmax.f32 %v1150, %v1151
          %1153 = vst [vmem:[%s355] sm:$0x1] %v1152
        $region52: #{tpu_custom_call.1} parent=39 // pred_fallthru
          _
        %p1154 = scmp.eq.s32.totalorder %s29, 0
        // Predicated region
        $region53: #{tpu_custom_call.1} parent=39 // pred_check
          %p1155 = pneg %p1154
        $region54: #{tpu_custom_call.1} parent=39 // pred_check_branch
          %1157 = sbr.rel (%p1155) target = $region56
        $region55: #{tpu_custom_call.1} parent=39 // pred_region
          %v1158 = vld [vmem:[#allocation2] sm:$0xff]
          %v1159 = vld [vmem:[#allocation2 + $0x8] sm:$0xff]
          %v1160 = vld [vmem:[#allocation2 + $0x10] sm:$0xff]
          %v1161 = vld [vmem:[#allocation2 + $0x18] sm:$0xff]
          %v1162 = vld [vmem:[#allocation2 + $0x20] sm:$0xff]
          %v1163 = vld [vmem:[#allocation2 + $0x28] sm:$0xff]
          %v1164 = vld [vmem:[#allocation2 + $0x30] sm:$0xff]
          %v1165 = vld [vmem:[#allocation2 + $0x38] sm:$0xff]
          %v1166 = vld [vmem:[#allocation2 + $0x40] sm:$0xff]
          %v1167 = vld [vmem:[#allocation2 + $0x48] sm:$0xff]
          %v1168 = vld [vmem:[#allocation2 + $0x50] sm:$0xff]
          %v1169 = vld [vmem:[#allocation2 + $0x58] sm:$0xff]
          %v1170 = vld [vmem:[#allocation2 + $0x60] sm:$0xff]
          %v1171 = vld [vmem:[#allocation2 + $0x68] sm:$0xff]
          %v1172 = vld [vmem:[#allocation2 + $0x70] sm:$0xff]
          %v1173 = vld [vmem:[#allocation2 + $0x78] sm:$0xff]
          %vm1174 = vcmask 7168
          %1175 = vst.msk [vmem:[%s382] sm:$0xff] %vm1174, %v1158
          %1176 = vst.msk [vmem:[%s382 + $0x8] sm:$0xff] %vm1174, %v1159
          %1177 = vst.msk [vmem:[%s382 + $0x10] sm:$0xff] %vm1174, %v1160
          %1178 = vst.msk [vmem:[%s382 + $0x18] sm:$0xff] %vm1174, %v1161
          %1179 = vst.msk [vmem:[%s382 + $0x20] sm:$0xff] %vm1174, %v1162
          %1180 = vst.msk [vmem:[%s382 + $0x28] sm:$0xff] %vm1174, %v1163
          %1181 = vst.msk [vmem:[%s382 + $0x30] sm:$0xff] %vm1174, %v1164
          %1182 = vst.msk [vmem:[%s382 + $0x38] sm:$0xff] %vm1174, %v1165
          %1183 = vst.msk [vmem:[%s382 + $0x40] sm:$0xff] %vm1174, %v1166
          %1184 = vst.msk [vmem:[%s382 + $0x48] sm:$0xff] %vm1174, %v1167
          %1185 = vst.msk [vmem:[%s382 + $0x50] sm:$0xff] %vm1174, %v1168
          %1186 = vst.msk [vmem:[%s382 + $0x58] sm:$0xff] %vm1174, %v1169
          %1187 = vst.msk [vmem:[%s382 + $0x60] sm:$0xff] %vm1174, %v1170
          %1188 = vst.msk [vmem:[%s382 + $0x68] sm:$0xff] %vm1174, %v1171
          %1189 = vst.msk [vmem:[%s382 + $0x70] sm:$0xff] %vm1174, %v1172
          %1190 = vst.msk [vmem:[%s382 + $0x78] sm:$0xff] %vm1174, %v1173
        $region56: #{tpu_custom_call.1} parent=39 // pred_fallthru
          _
        %p1191 = scmp.gt.s32.totalorder %s29, 0
        // Predicated region
        $region57: #{tpu_custom_call.1} parent=39 // pred_check
          %p1192 = pneg %p1191
        $region58: #{tpu_custom_call.1} parent=39 // pred_check_branch
          %1194 = sbr.rel (%p1192) target = $region60
        $region59: #{tpu_custom_call.1} parent=39 // pred_region
          %v1195 = vld [vmem:[%s382] sm:$0xff]
          %v1196 = vld [vmem:[%s382 + $0x8] sm:$0xff]
          %v1197 = vld [vmem:[%s382 + $0x10] sm:$0xff]
          %v1198 = vld [vmem:[%s382 + $0x18] sm:$0xff]
          %v1199 = vld [vmem:[%s382 + $0x20] sm:$0xff]
          %v1200 = vld [vmem:[%s382 + $0x28] sm:$0xff]
          %v1201 = vld [vmem:[%s382 + $0x30] sm:$0xff]
          %v1202 = vld [vmem:[%s382 + $0x38] sm:$0xff]
          %v1203 = vld [vmem:[%s382 + $0x40] sm:$0xff]
          %v1204 = vld [vmem:[%s382 + $0x48] sm:$0xff]
          %v1205 = vld [vmem:[%s382 + $0x50] sm:$0xff]
          %v1206 = vld [vmem:[%s382 + $0x58] sm:$0xff]
          %v1207 = vld [vmem:[%s382 + $0x60] sm:$0xff]
          %v1208 = vld [vmem:[%s382 + $0x68] sm:$0xff]
          %v1209 = vld [vmem:[%s382 + $0x70] sm:$0xff]
          %v1210 = vld [vmem:[%s382 + $0x78] sm:$0xff]
          %v1211 = vld [vmem:[#allocation2] sm:$0xff]
          %v1212 = vld [vmem:[#allocation2 + $0x8] sm:$0xff]
          %v1213 = vld [vmem:[#allocation2 + $0x10] sm:$0xff]
          %v1214 = vld [vmem:[#allocation2 + $0x18] sm:$0xff]
          %v1215 = vld [vmem:[#allocation2 + $0x20] sm:$0xff]
          %v1216 = vld [vmem:[#allocation2 + $0x28] sm:$0xff]
          %v1217 = vld [vmem:[#allocation2 + $0x30] sm:$0xff]
          %v1218 = vld [vmem:[#allocation2 + $0x38] sm:$0xff]
          %v1219 = vld [vmem:[#allocation2 + $0x40] sm:$0xff]
          %v1220 = vld [vmem:[#allocation2 + $0x48] sm:$0xff]
          %v1221 = vld [vmem:[#allocation2 + $0x50] sm:$0xff]
          %v1222 = vld [vmem:[#allocation2 + $0x58] sm:$0xff]
          %v1223 = vld [vmem:[#allocation2 + $0x60] sm:$0xff]
          %v1224 = vld [vmem:[#allocation2 + $0x68] sm:$0xff]
          %v1225 = vld [vmem:[#allocation2 + $0x70] sm:$0xff]
          %v1226 = vld [vmem:[#allocation2 + $0x78] sm:$0xff]
          %v1227 = vmax.f32 %v1195, %v1211
          %v1228 = vmax.f32 %v1196, %v1212
          %v1229 = vmax.f32 %v1197, %v1213
          %v1230 = vmax.f32 %v1198, %v1214
          %v1231 = vmax.f32 %v1199, %v1215
          %v1232 = vmax.f32 %v1200, %v1216
          %v1233 = vmax.f32 %v1201, %v1217
          %v1234 = vmax.f32 %v1202, %v1218
          %v1235 = vmax.f32 %v1203, %v1219
          %v1236 = vmax.f32 %v1204, %v1220
          %v1237 = vmax.f32 %v1205, %v1221
          %v1238 = vmax.f32 %v1206, %v1222
          %v1239 = vmax.f32 %v1207, %v1223
          %v1240 = vmax.f32 %v1208, %v1224
          %v1241 = vmax.f32 %v1209, %v1225
          %v1242 = vmax.f32 %v1210, %v1226
          %vm1243 = vcmask 7168
          %1244 = vst.msk [vmem:[%s382] sm:$0xff] %vm1243, %v1227
          %1245 = vst.msk [vmem:[%s382 + $0x8] sm:$0xff] %vm1243, %v1228
          %1246 = vst.msk [vmem:[%s382 + $0x10] sm:$0xff] %vm1243, %v1229
          %1247 = vst.msk [vmem:[%s382 + $0x18] sm:$0xff] %vm1243, %v1230
          %1248 = vst.msk [vmem:[%s382 + $0x20] sm:$0xff] %vm1243, %v1231
          %1249 = vst.msk [vmem:[%s382 + $0x28] sm:$0xff] %vm1243, %v1232
          %1250 = vst.msk [vmem:[%s382 + $0x30] sm:$0xff] %vm1243, %v1233
          %1251 = vst.msk [vmem:[%s382 + $0x38] sm:$0xff] %vm1243, %v1234
          %1252 = vst.msk [vmem:[%s382 + $0x40] sm:$0xff] %vm1243, %v1235
          %1253 = vst.msk [vmem:[%s382 + $0x48] sm:$0xff] %vm1243, %v1236
          %1254 = vst.msk [vmem:[%s382 + $0x50] sm:$0xff] %vm1243, %v1237
          %1255 = vst.msk [vmem:[%s382 + $0x58] sm:$0xff] %vm1243, %v1238
          %1256 = vst.msk [vmem:[%s382 + $0x60] sm:$0xff] %vm1243, %v1239
          %1257 = vst.msk [vmem:[%s382 + $0x68] sm:$0xff] %vm1243, %v1240
          %1258 = vst.msk [vmem:[%s382 + $0x70] sm:$0xff] %vm1243, %v1241
          %1259 = vst.msk [vmem:[%s382 + $0x78] sm:$0xff] %vm1243, %v1242
        $region60: #{tpu_custom_call.1} parent=39 // pred_fallthru
          _
        %s1260 = smul.u32 16, %s28
        %p1261 = scmp.lt.s32.totalorder %s1260, 31
        %s1262 = scalar_select %p1261, %s1260, 31
        %s1263 = smul.addr %s1262, 8
        %s1264 = scalar_lea.vmem %s5, %s1263
        %s1265 = sand.u32 %s204, 1
        %s1266 = scalar_lea.sflag [#allocation5], %s1265
        %s1267 = sand.u32 %s204, 1
        %s1268 = scalar_lea.vmem [#allocation6], %s1267
        // Predicated region
        $region61: #{tpu_custom_call.1} parent=39 // pred_check
          %p1269 = pneg %p186
        $region62: #{tpu_custom_call.1} parent=39 // pred_check_branch
          %1271 = sbr.rel (%p1269) target = $region64
        $region63: #{tpu_custom_call.1} parent=39 // pred_region
          %s1272 = smul.u32 16, %s28
        $region64: #{tpu_custom_call.1} parent=39 // pred_fallthru
          _
        // Predicated region
        $region65: #{tpu_custom_call.1} parent=39 // pred_check
          %p1273 = pneg %p214
        $region66: #{tpu_custom_call.1} parent=39 // pred_check_branch
          %1275 = sbr.rel (%p1273) target = $region68
        $region67: #{tpu_custom_call.1} parent=39 // pred_region
          %1277 = vsyncadd %s1266, 0
          %s1278 = smul.addr %s28, 2
          %s1279 = sadd.s32 %s29, %s1278
          %s1280 = scalar_lea.hbm %s6, %s1279
          %s1282 = sshll.u32 %s1268, 4
          %s1283 = int_to_ptr.vmem [resolvable:$true] %s1282
          %s1284 = sshll.u32 %s1280, 4
          %s1285 = int_to_ptr.hbm [resolvable:$true] %s1284
          %1287 = dma.vmem_to_hbm [thread:$0]  %s1283, 16, %s1285, %s1266
        $region68: #{tpu_custom_call.1} parent=39 // pred_fallthru
          _
      $region40: #{tpu_custom_call.1} parent=5 // pred_fallthru
        _
      %p1288 = scmp.le.s32.totalorder 2, %s19
      // Predicated region
      $region69: #{tpu_custom_call.1} parent=5 // pred_check
        %p1289 = pneg %p1288
      $region70: #{tpu_custom_call.1} parent=5 // pred_check_branch
        %1291 = sbr.rel (%p1289) target = $region72
      $region71: #{tpu_custom_call.1} parent=5 // pred_region
        %s1292 = ssub.s32 %s19, 2
        // Predicated region
        $region73: #{tpu_custom_call.1} parent=71 // pred_check
          %p1293 = pneg %p192
        $region74: #{tpu_custom_call.1} parent=71 // pred_check_branch
          %1295 = sbr.rel (%p1293) target = $region76
        $region75: #{tpu_custom_call.1} parent=71 // pred_region
          %s1296 = smul.u32 16, %s30
          %p1297 = scmp.lt.s32.totalorder %s1296, 31
          %s1298 = scalar_select %p1297, %s1296, 31
          %s1299 = smul.addr %s1298, 8
          %s1300 = scalar_lea.vmem %s5, %s1299
        $region76: #{tpu_custom_call.1} parent=71 // pred_fallthru
          _
        // Predicated region
        $region77: #{tpu_custom_call.1} parent=71 // pred_check
          %p1301 = pneg %p220
        $region78: #{tpu_custom_call.1} parent=71 // pred_check_branch
          %1303 = sbr.rel (%p1301) target = $region80
        $region79: #{tpu_custom_call.1} parent=71 // pred_region
          %s1304 = sand.u32 %s205, 1
          %s1305 = scalar_lea.sflag [#allocation5], %s1304
          %s1306 = sand.u32 %s205, 1
          %s1307 = scalar_lea.vmem [#allocation6], %s1306
          %1309 = dma.done %s1305, 16
        $region80: #{tpu_custom_call.1} parent=71 // pred_fallthru
          _
      $region72: #{tpu_custom_call.1} parent=5 // pred_fallthru
        _
    $region6: #{tpu_custom_call.1} parent=1 // loop_footer
      %s23 = sadd.s32 1, %s19
    $region7: #{tpu_custom_call.1} parent=1 // loop_footer_branch
      %18 = sbr.rel target = $region3
    $region8: #{tpu_custom_call.1} parent=1 // loop_exit
      _
    %1310 = vsyncpa [#allocation4], 1
    %s1311 = scalar_lea.sflag [#allocation4], 1
    %1312 = vsyncpa %s1311, 1
    %1313 = vsyncpa [#allocation5], 1
    %s1314 = scalar_lea.sflag [#allocation5], 1
    %1315 = vsyncpa %s1314, 1

</llo_original>
